<compile_context>
chip_gen: v6e
topology: v6e:2x2x1
jax: 0.10.0
libtpu: 0.0.40
codegen_flags: <defaults>
</compile_context>

<pallas_src>
import jax
import jax.numpy as jnp
from jax.experimental import pallas as pl
from jax.experimental.pallas import tpu as pltpu

_TILE_BYTES = 4 * 1024 * 1024            # ~4 MiB per tile (per buffer)
_VMEM_LIMIT_BYTES = 48 * 1024 * 1024     # explicit scoped-VMEM budget (safe on v5e/v6e/v7x)
_DEFAULT_MIN_PALLAS_BYTES = 256 * 1024   # below this, fused jnp wins over a pallas_call


def _h_swish_math(x):
    # h_sigmoid(x) = ReLU6(x + 3) / 6 = clip(x + 3, 0, 6) * (1/6)
    return x * (jnp.clip(x + 3.0, 0.0, 6.0) * (1.0 / 6.0))


def _h_swish_kernel(x_ref, o_ref):
    o_ref[...] = _h_swish_math(x_ref[...]).astype(o_ref.dtype)


def h_swish(x: jax.Array, *, min_pallas_bytes: int = _DEFAULT_MIN_PALLAS_BYTES) -> jax.Array:
    """h_swish on any-rank tensor (elementwise), NCHW in the original module."""
    orig_shape = x.shape
    dtype = x.dtype
    total = x.size

    if total == 0:
        return x

    itemsize = jnp.dtype(dtype).itemsize
    if total * itemsize < min_pallas_bytes:
        # Tiny tensor: a 1-step pallas_call is dominated by dispatch/pipeline
        # overhead; let XLA fuse the elementwise instead.
        return _h_swish_math(x)

    # Sublane packing multiple per dtype (f32: 8, bf16/f16: 16, int8/fp8: 32).
    sub = {4: 8, 2: 16, 1: 32}.get(itemsize, 8)

    xf = x.reshape(-1)

    # Lane width: largest of {512, 256, 128} dividing the element count (all are
    # multiples of 128 -> unmasked full-width vector stores).  If none divides,
    # run the kernel on the 512-aligned prefix and do the tiny tail in jnp.
    lane = next((c for c in (512, 256, 128) if total % c == 0), 512)
    aligned = (total // lane) * lane
    if aligned == 0:
        return _h_swish_math(x)

    n_rows = aligned // lane

    # Tile rows: ~4 MiB per tile, a multiple of `sub`, and at most
    # ceil(n_rows/2) rounded up to `sub` so the grid has >=2 steps and both
    # v7x TensorCores get work.
    tm_target = max(sub, (_TILE_BYTES // (lane * itemsize)) // sub * sub)
    if n_rows < sub:
        tm = n_rows                                   # block == full array (tiny input)
    else:
        half = -(-((n_rows + 1) // 2) // sub) * sub   # round_up(ceil(n_rows/2), sub)
        tm = min(tm_target, half)

    grid = (pl.cdiv(n_rows, tm),)                     # ragged last block is masked by Pallas

    head2d = xf[:aligned].reshape(n_rows, lane)
    out2d = pl.pallas_call(
        _h_swish_kernel,
        out_shape=jax.ShapeDtypeStruct((n_rows, lane), dtype),
        grid=grid,
        in_specs=[pl.BlockSpec((tm, lane), lambda i: (i, 0))],
        out_specs=pl.BlockSpec((tm, lane), lambda i: (i, 0)),
        compiler_params=pltpu.CompilerParams(
            dimension_semantics=("parallel",),
            vmem_limit_bytes=_VMEM_LIMIT_BYTES,
        ),
    )(head2d)

    if aligned == total:
        # Common case: no padding was ever applied -> direct free reshape.
        return out2d.reshape(orig_shape)

    # Rare misaligned case (< lane leftover elements): compute the tail with jnp
    # and stitch it back on (cheaper than padding + slicing the whole tensor).
    tail_out = _h_swish_math(xf[aligned:])
    return jnp.concatenate([out2d.reshape(-1), tail_out]).reshape(orig_shape)


if __name__ == "__main__":
    key = jax.random.PRNGKey(0)
    k1, k2, k3, k4 = jax.random.split(key, 4)

    tests = [
        # NCHW shape matching the module's typical usage; 2048 elems -> lane 512,
        # single full block.
        jax.random.normal(k1, (2, 4, 16, 16), jnp.float32) * 4.0,
        # 40 rows of 512 -> tm = 24, ragged (masked) last block.
        jax.random.normal(k2, (2, 40, 16, 16), jnp.float32) * 4.0,
        # Element count not a multiple of 128 -> aligned prefix + jnp tail.
        jax.random.normal(k3, (3, 5, 7, 11), jnp.float32) * 4.0,
        # bf16 input exercises the sub=16 path.
        (jax.random.normal(k4, (2, 4, 16, 16), jnp.float32) * 4.0).astype(jnp.bfloat16),
    ]

    for x in tests:
        out = jax.block_until_ready(h_swish(x, min_pallas_bytes=0))  # force Pallas path
        ref = _h_swish_math(x)
        assert out.shape == x.shape and out.dtype == x.dtype
        tol = 1e-2 if x.dtype == jnp.bfloat16 else 1e-6
        assert jnp.allclose(out.astype(jnp.float32), ref.astype(jnp.float32),
                            atol=tol, rtol=tol), "mismatch vs reference"

    # Default dispatch: tiny tensors take the fused-jnp fast path.
    x0 = tests[0]
    out0 = jax.block_until_ready(h_swish(x0))
    assert jnp.allclose(out0, _h_swish_math(x0), atol=1e-6, rtol=1e-6)

    print("KERNEL_OK")
</pallas_src>

<mosaic_0001>
module attributes {stable_mosaic.version = 11 : i64} {
  func.func @_h_swish_kernel(%arg0: i32, %arg1: memref<4x512xf32, #tpu.memory_space<vmem>>, %arg2: memref<4x512xf32, #tpu.memory_space<vmem>>) attributes {dimension_semantics = [#tpu.dimension_semantics<parallel>], iteration_bounds = array<i64: 1>, scalar_prefetch = 0 : i64, scratch_operands = 0 : i64, tpu.core_type = #tpu.core_type<tc>, window_params = [{transform_indices = @transform_0, window_bounds = array<i64: 4, 512>}, {transform_indices = @transform_1, window_bounds = array<i64: 4, 512>}]} {
    %c0 = arith.constant 0 : index
    %c0_0 = arith.constant 0 : index
    %0 = vector.load %arg1[%c0, %c0_0] : memref<4x512xf32, #tpu.memory_space<vmem>>, vector<4x512xf32>
    %cst = arith.constant 3.000000e+00 : f32
    %1 = vector.broadcast %cst : f32 to vector<4x512xf32>
    %2 = arith.addf %0, %1 : vector<4x512xf32>
    %cst_1 = arith.constant 0.000000e+00 : f32
    %cst_2 = arith.constant 6.000000e+00 : f32
    %3 = vector.broadcast %cst_1 : f32 to vector<4x512xf32>
    %4 = arith.maximumf %3, %2 : vector<4x512xf32>
    %5 = vector.broadcast %cst_2 : f32 to vector<4x512xf32>
    %6 = arith.minimumf %5, %4 : vector<4x512xf32>
    %cst_3 = arith.constant 0.166666672 : f32
    %7 = vector.broadcast %cst_3 : f32 to vector<4x512xf32>
    %8 = arith.mulf %6, %7 : vector<4x512xf32>
    %9 = arith.mulf %0, %8 : vector<4x512xf32>
    %c0_4 = arith.constant 0 : index
    %c0_5 = arith.constant 0 : index
    %10 = vector.load %arg2[%c0_4, %c0_5] : memref<4x512xf32, #tpu.memory_space<vmem>>, vector<4x512xf32>
    tpu.vector_store %arg2[%c0_4, %c0_5], %9 {strides = array<i32>} : memref<4x512xf32, #tpu.memory_space<vmem>>, vector<4x512xf32>,
    return
  }
  func.func @transform_0(%arg0: i32) -> (i32, i32) {
    %c0_i32 = arith.constant 0 : i32
    %c0_i32_0 = arith.constant 0 : i32
    return %arg0, %c0_i32 : i32, i32
  }
  func.func @transform_1(%arg0: i32) -> (i32, i32) {
    %c0_i32 = arith.constant 0 : i32
    %c0_i32_0 = arith.constant 0 : i32
    return %arg0, %c0_i32 : i32, i32
  }
}

</mosaic_0001>

<llo_original>
// kernel: tpu_custom_call.1
$region0: #{tpu_custom_call.1}
  #allocation0 [shape = 'u32[]', space=smem, size = 0x4, offset = 0x4, fixed_abs, tag = 'smem constant byte address 0x4 - core index']
  #allocation1 [shape = 'u32[144,128]{1,0:T(1,128)}', space=vmem, size = 0x12000, scoped, tag = 'internal scratch']
  %s0 = inlined_call_operand.hbm [shape: f32[4,512], index: 0, kind: input, shape index: {}]
  %s1 = inlined_call_operand.hbm [shape: f32[4,512], index: 1, kind: output, shape index: {}]
  %s2 = sld [smem:[#allocation0]]
  $region18: #{tpu_custom_call.1} parent=0
    _
  %s4 = ssub.s32 1, %s2
  %s5 = scalar_select 0, %s4, %s2
  $region1: #{tpu_custom_call.1} parent=0
    #allocation2 [shape = 'u8[8192]{0}', space=vmem, size = 0x2000, scoped, tag = 'input window, operand 0, single buffered']
    #allocation3 [shape = 's32[1]{0}', space=sflag, size = 0x4, scoped, tag = 'scoped memory for tpu_custom_call.1']
    #allocation4 [shape = 's32[1]{0}', space=sflag, size = 0x4, scoped, tag = 'scoped memory for tpu_custom_call.1']
    #allocation5 [shape = 'u8[8192]{0}', space=vmem, size = 0x2000, scoped, tag = 'output window, operand 0, single buffered']
    %6 = vsyncpa [#allocation3], 0
    %7 = vsyncpa [#allocation4], 0
    // Predicated region
    $region2: #{tpu_custom_call.1} parent=1 // pred_check
      _
    $region3: #{tpu_custom_call.1} parent=1 // pred_check_branch
      %9 = sbr.rel (0) target = $region5
    $region4: #{tpu_custom_call.1} parent=1 // pred_region
      %s11 = ssub.s32 256, 256
      %12 = vsyncadd [#allocation3], %s11
      %s14 = sshll.u32 [#allocation2], 4
      %s15 = int_to_ptr.vmem [resolvable:$true] %s14
      %17 = dma.hbm_to_vmem [thread:$0]  %s0, 256, %s15, [#allocation3]
    $region5: #{tpu_custom_call.1} parent=1 // pred_fallthru
      _
    // Predicated region
    $region6: #{tpu_custom_call.1} parent=1 // pred_check
      _
    $region7: #{tpu_custom_call.1} parent=1 // pred_check_branch
      %19 = sbr.rel (0) target = $region9
    $region8: #{tpu_custom_call.1} parent=1 // pred_region
      %20 = dma.done [#allocation3], 256
    $region9: #{tpu_custom_call.1} parent=1 // pred_fallthru
      _
    %v21 = vld [vmem:[#allocation2] sm:$0xff]
    %v22 = vld [vmem:[#allocation2 + $0x8] sm:$0xff]
    %v23 = vadd.f32 %v21, 3.0
    %v24 = vadd.f32 %v22, 3.0
    %v25 = vmax.f32 %v23, 0.0
    %v26 = vmax.f32 %v24, 0.0
    %v27 = vmin.f32 %v25, 6.0
    %v28 = vmin.f32 %v26, 6.0
    %v29 = vmul.f32 %v27, 0.16666667
    %v30 = vmul.f32 %v28, 0.16666667
    %v31 = vmul.f32 %v21, %v29
    %v32 = vmul.f32 %v22, %v30
    %33 = vst [vmem:[#allocation5] sm:$0xff] %v31
    %34 = vst [vmem:[#allocation5 + $0x8] sm:$0xff] %v32
    // Predicated region
    $region10: #{tpu_custom_call.1} parent=1 // pred_check
      _
    $region11: #{tpu_custom_call.1} parent=1 // pred_check_branch
      %36 = sbr.rel (0) target = $region13
    $region12: #{tpu_custom_call.1} parent=1 // pred_region
      %s38 = ssub.s32 256, 256
      %39 = vsyncadd [#allocation4], %s38
      %s41 = sshll.u32 [#allocation5], 4
      %s42 = int_to_ptr.vmem [resolvable:$true] %s41
      %44 = dma.vmem_to_hbm [thread:$0]  %s42, 256, %s1, [#allocation4]
    $region13: #{tpu_custom_call.1} parent=1 // pred_fallthru
      _
    // Predicated region
    $region14: #{tpu_custom_call.1} parent=1 // pred_check
      _
    $region15: #{tpu_custom_call.1} parent=1 // pred_check_branch
      %46 = sbr.rel (0) target = $region17
    $region16: #{tpu_custom_call.1} parent=1 // pred_region
      %47 = dma.done [#allocation4], 256
    $region17: #{tpu_custom_call.1} parent=1 // pred_fallthru
      _
    %48 = vsyncpa [#allocation3], 1
    %49 = vsyncpa [#allocation4], 1

</llo_original>
